<compile_context>
chip_gen: v7x
topology: tpu7x:2x2x1
jax: 0.10.0
libtpu: 0.0.40
codegen_flags: <defaults>
</compile_context>

<pallas_src>
import jax
import jax.numpy as jnp
from jax import lax
from jax.experimental import pallas as pl
from jax.experimental.pallas import tpu as pltpu

C_OUT = 8  # out_channels of both convs


def fused_conv_pad_relu_kernel(wb_ref, x_ref, o_ref):
    """relu(w_eff * zeropad(x) + b_eff), written directly in NCHW.

    wb_ref: SMEM (C_OUT, 2) f32   col 0 = w_eff = 4*w1+2*w2, col 1 = b_eff = 4*b1+2*b2
    x_ref : VMEM (1, 1, H, W) f32
    o_ref : VMEM (1, C_OUT, H+2, W+2) f32
    """
    h, w = x_ref.shape[2], x_ref.shape[3]
    hp, wp = h + 2, w + 2

    x = x_ref[0, 0]                                            # (H, W)

    # Column zero-pad via a tiny shift matmul: S[i, i+1] = 1 so (x @ S)[:, c] = x[:, c-1]
    # and columns 0 / W+1 are exactly 0.  Pure data movement (one lane shift).
    r = lax.broadcasted_iota(jnp.int32, (w, wp), 0)
    c = lax.broadcasted_iota(jnp.int32, (w, wp), 1)
    shift = jnp.where(c == r + 1, 1.0, 0.0).astype(jnp.float32)  # (W, Wp)
    x_cpad = jnp.dot(x, shift, preferred_element_type=jnp.float32)  # (H, Wp)

    # Per output channel (static unroll, C_OUT == 8):
    #   1) full-block fill with the border value relu(b)   (1x1 conv over zero pad == bias)
    #   2) overwrite rows 1..H with relu(w*x + b); the padded columns already equal relu(b).
    for ci in range(C_OUT):
        w_c = wb_ref[ci, 0]
        b_c = wb_ref[ci, 1]
        o_ref[0, ci] = jnp.maximum(jnp.full((hp, wp), b_c, jnp.float32), 0.0)
        o_ref[0, ci, 1:1 + h, :] = jnp.maximum(w_c * x_cpad + b_c, 0.0)


def model_forward(x, w1, b1, w2, b2):
    """x: (1, 1, H, W); w*: (C_OUT, 1, 1, 1); b*: (C_OUT,). Returns (1, C_OUT, H+2, W+2)."""
    n, cin, h, w = x.shape
    assert n == 1 and cin == 1, "module is defined for N=1, C_in=1"
    # TODO(synk): for batched inputs add a grid over N with dimension_semantics=("parallel",)
    #             (shards across the two v7x TensorCores); at N=1 a grid is pure overhead.
    hp, wp = h + 2, w + 2

    # Fold the torch graph once: v8 = 4*conv1(x) + 2*conv2(x).
    w_eff = (4.0 * w1 + 2.0 * w2).reshape(C_OUT, 1)
    b_eff = (4.0 * b1 + 2.0 * b2).reshape(C_OUT, 1)
    wb = jnp.concatenate([w_eff, b_eff], axis=1).astype(jnp.float32)  # (C_OUT, 2)

    return pl.pallas_call(
        fused_conv_pad_relu_kernel,
        out_shape=jax.ShapeDtypeStruct((1, C_OUT, hp, wp), jnp.float32),
        in_specs=[
            pl.BlockSpec(memory_space=pltpu.MemorySpace.SMEM),   # wb (per-channel scalars)
            pl.BlockSpec(memory_space=pltpu.MemorySpace.VMEM),   # x
        ],
        out_specs=pl.BlockSpec(memory_space=pltpu.MemorySpace.VMEM),
        cost_estimate=pl.CostEstimate(
            flops=2 * h * w * wp + 3 * C_OUT * hp * wp,
            bytes_accessed=4 * (C_OUT * 2 + h * w + C_OUT * hp * wp),
            transcendentals=0,
        ),
    )(wb, x.astype(jnp.float32))


model_forward_jit = jax.jit(model_forward)


def reference_forward(x, w1, b1, w2, b2):
    """Pure-JAX mirror of the torch graph (1x1 convs with padding=1)."""
    x_pad = jnp.pad(x, ((0, 0), (0, 0), (1, 1), (1, 1)))
    c1 = w1.reshape(1, C_OUT, 1, 1) * x_pad + b1.reshape(1, C_OUT, 1, 1)
    c2 = w2.reshape(1, C_OUT, 1, 1) * x_pad + b2.reshape(1, C_OUT, 1, 1)
    v5 = c1 + c1
    v6 = c1 + c2
    v7 = c1 + c2
    return jnp.maximum(v5 + v6 + v7, 0.0)


if __name__ == "__main__":
    key = jax.random.PRNGKey(0)
    k_x, k_w1, k_b1, k_w2, k_b2 = jax.random.split(key, 5)

    # small input consistent with the module: N=1, C_in=1, spatial 16x16
    x = jax.random.normal(k_x, (1, 1, 16, 16), dtype=jnp.float32)

    # deterministic synthetic conv parameters (Conv2d(1, 8, 1) shapes)
    w1 = jax.random.normal(k_w1, (C_OUT, 1, 1, 1), dtype=jnp.float32) * 0.5
    b1 = jax.random.normal(k_b1, (C_OUT,), dtype=jnp.float32) * 0.1
    w2 = jax.random.normal(k_w2, (C_OUT, 1, 1, 1), dtype=jnp.float32) * 0.5
    b2 = jax.random.normal(k_b2, (C_OUT,), dtype=jnp.float32) * 0.1

    y = model_forward_jit(x, w1, b1, w2, b2)
    jax.block_until_ready(y)

    y_ref = reference_forward(x, w1, b1, w2, b2)
    assert y.shape == (1, C_OUT, 18, 18), y.shape
    assert jnp.allclose(y, y_ref, atol=1e-5, rtol=1e-5), "mismatch vs reference"

    print("KERNEL_OK")
</pallas_src>

<mosaic_0001>
module attributes {stable_mosaic.version = 11 : i64} {
  func.func @fused_conv_pad_relu_kernel(%arg0: memref<8x2xf32, #tpu.memory_space<smem>>, %arg1: memref<1x1x16x16xf32, #tpu.memory_space<vmem>>, %arg2: memref<1x8x18x18xf32, #tpu.memory_space<vmem>>) attributes {dimension_semantics = [], scalar_prefetch = 0 : i64, scratch_operands = 0 : i64, tpu.core_type = #tpu.core_type<tc>} {
    %c0 = arith.constant 0 : index
    %c0_0 = arith.constant 0 : index
    %c0_1 = arith.constant 0 : index
    %c0_2 = arith.constant 0 : index
    %0 = vector.load %arg1[%c0, %c0_0, %c0_1, %c0_2] : memref<1x1x16x16xf32, #tpu.memory_space<vmem>>, vector<1x1x16x16xf32>
    %1 = vector.shape_cast %0 : vector<1x1x16x16xf32> to vector<16x16xf32>
    %2 = tpu.iota {dimensions = array<i32: 0>} : vector<16x18xi32>
    %3 = tpu.iota {dimensions = array<i32: 1>} : vector<16x18xi32>
    %c1_i32 = arith.constant 1 : i32
    %4 = vector.broadcast %c1_i32 : i32 to vector<16x18xi32>
    %5 = arith.addi %2, %4 : vector<16x18xi32>
    %6 = arith.cmpi eq, %3, %5 : vector<16x18xi32>
    %cst = arith.constant 1.000000e+00 : f32
    %cst_3 = arith.constant 0.000000e+00 : f32
    %7 = vector.broadcast %cst : f32 to vector<16x18xf32>
    %8 = vector.broadcast %cst_3 : f32 to vector<16x18xf32>
    %9 = arith.select %6, %7, %8 : vector<16x18xi1>, vector<16x18xf32>
    %cst_4 = arith.constant dense<0.000000e+00> : vector<16x18xf32>
    %10 = tpu.matmul %1, %9, %cst_4 {dimension_numbers = #tpu.dot_dimension_numbers<[1], [0], [0], [1], [0, 0, 1, 1], [], []>} : vector<16x16xf32>, vector<16x18xf32>, vector<16x18xf32> -> vector<16x18xf32>
    %c0_5 = arith.constant 0 : index
    %c0_6 = arith.constant 0 : index
    %11 = memref.load %arg0[%c0_5, %c0_6] : memref<8x2xf32, #tpu.memory_space<smem>>
    %c0_7 = arith.constant 0 : index
    %c1 = arith.constant 1 : index
    %12 = memref.load %arg0[%c0_7, %c1] : memref<8x2xf32, #tpu.memory_space<smem>>
    %13 = vector.broadcast %12 : f32 to vector<18x18xf32>
    %cst_8 = arith.constant 0.000000e+00 : f32
    %14 = vector.broadcast %cst_8 : f32 to vector<18x18xf32>
    %15 = arith.maximumf %13, %14 : vector<18x18xf32>
    %c0_9 = arith.constant 0 : index
    %c0_10 = arith.constant 0 : index
    %c0_11 = arith.constant 0 : index
    %c0_12 = arith.constant 0 : index
    %16 = vector.load %arg2[%c0_9, %c0_10, %c0_11, %c0_12] : memref<1x8x18x18xf32, #tpu.memory_space<vmem>>, vector<1x1x18x18xf32>
    %17 = vector.shape_cast %16 : vector<1x1x18x18xf32> to vector<18x18xf32>
    %18 = vector.shape_cast %15 : vector<18x18xf32> to vector<1x1x18x18xf32>
    tpu.vector_store %arg2[%c0_9, %c0_10, %c0_11, %c0_12], %18 {strides = array<i32>} : memref<1x8x18x18xf32, #tpu.memory_space<vmem>>, vector<1x1x18x18xf32>,
    %19 = vector.broadcast %11 : f32 to vector<16x18xf32>
    %20 = arith.mulf %19, %10 : vector<16x18xf32>
    %21 = vector.broadcast %12 : f32 to vector<16x18xf32>
    %22 = arith.addf %20, %21 : vector<16x18xf32>
    %cst_13 = arith.constant 0.000000e+00 : f32
    %23 = vector.broadcast %cst_13 : f32 to vector<16x18xf32>
    %24 = arith.maximumf %22, %23 : vector<16x18xf32>
    %c0_14 = arith.constant 0 : index
    %c0_15 = arith.constant 0 : index
    %c1_16 = arith.constant 1 : index
    %c0_17 = arith.constant 0 : index
    %25 = vector.load %arg2[%c0_14, %c0_15, %c1_16, %c0_17] : memref<1x8x18x18xf32, #tpu.memory_space<vmem>>, vector<1x1x16x18xf32>
    %26 = vector.shape_cast %25 : vector<1x1x16x18xf32> to vector<16x18xf32>
    %27 = vector.shape_cast %24 : vector<16x18xf32> to vector<1x1x16x18xf32>
    tpu.vector_store %arg2[%c0_14, %c0_15, %c1_16, %c0_17], %27 {strides = array<i32>} : memref<1x8x18x18xf32, #tpu.memory_space<vmem>>, vector<1x1x16x18xf32>,
    %c1_18 = arith.constant 1 : index
    %c0_19 = arith.constant 0 : index
    %28 = memref.load %arg0[%c1_18, %c0_19] : memref<8x2xf32, #tpu.memory_space<smem>>
    %c1_20 = arith.constant 1 : index
    %c1_21 = arith.constant 1 : index
    %29 = memref.load %arg0[%c1_20, %c1_21] : memref<8x2xf32, #tpu.memory_space<smem>>
    %30 = vector.broadcast %29 : f32 to vector<18x18xf32>
    %cst_22 = arith.constant 0.000000e+00 : f32
    %31 = vector.broadcast %cst_22 : f32 to vector<18x18xf32>
    %32 = arith.maximumf %30, %31 : vector<18x18xf32>
    %c0_23 = arith.constant 0 : index
    %c1_24 = arith.constant 1 : index
    %c0_25 = arith.constant 0 : index
    %c0_26 = arith.constant 0 : index
    %33 = vector.load %arg2[%c0_23, %c1_24, %c0_25, %c0_26] : memref<1x8x18x18xf32, #tpu.memory_space<vmem>>, vector<1x1x18x18xf32>
    %34 = vector.shape_cast %33 : vector<1x1x18x18xf32> to vector<18x18xf32>
    %35 = vector.shape_cast %32 : vector<18x18xf32> to vector<1x1x18x18xf32>
    tpu.vector_store %arg2[%c0_23, %c1_24, %c0_25, %c0_26], %35 {strides = array<i32>} : memref<1x8x18x18xf32, #tpu.memory_space<vmem>>, vector<1x1x18x18xf32>,
    %36 = vector.broadcast %28 : f32 to vector<16x18xf32>
    %37 = arith.mulf %36, %10 : vector<16x18xf32>
    %38 = vector.broadcast %29 : f32 to vector<16x18xf32>
    %39 = arith.addf %37, %38 : vector<16x18xf32>
    %cst_27 = arith.constant 0.000000e+00 : f32
    %40 = vector.broadcast %cst_27 : f32 to vector<16x18xf32>
    %41 = arith.maximumf %39, %40 : vector<16x18xf32>
    %c0_28 = arith.constant 0 : index
    %c1_29 = arith.constant 1 : index
    %c1_30 = arith.constant 1 : index
    %c0_31 = arith.constant 0 : index
    %42 = vector.load %arg2[%c0_28, %c1_29, %c1_30, %c0_31] : memref<1x8x18x18xf32, #tpu.memory_space<vmem>>, vector<1x1x16x18xf32>
    %43 = vector.shape_cast %42 : vector<1x1x16x18xf32> to vector<16x18xf32>
    %44 = vector.shape_cast %41 : vector<16x18xf32> to vector<1x1x16x18xf32>
    tpu.vector_store %arg2[%c0_28, %c1_29, %c1_30, %c0_31], %44 {strides = array<i32>} : memref<1x8x18x18xf32, #tpu.memory_space<vmem>>, vector<1x1x16x18xf32>,
    %c2 = arith.constant 2 : index
    %c0_32 = arith.constant 0 : index
    %45 = memref.load %arg0[%c2, %c0_32] : memref<8x2xf32, #tpu.memory_space<smem>>
    %c2_33 = arith.constant 2 : index
    %c1_34 = arith.constant 1 : index
    %46 = memref.load %arg0[%c2_33, %c1_34] : memref<8x2xf32, #tpu.memory_space<smem>>
    %47 = vector.broadcast %46 : f32 to vector<18x18xf32>
    %cst_35 = arith.constant 0.000000e+00 : f32
    %48 = vector.broadcast %cst_35 : f32 to vector<18x18xf32>
    %49 = arith.maximumf %47, %48 : vector<18x18xf32>
    %c0_36 = arith.constant 0 : index
    %c2_37 = arith.constant 2 : index
    %c0_38 = arith.constant 0 : index
    %c0_39 = arith.constant 0 : index
    %50 = vector.load %arg2[%c0_36, %c2_37, %c0_38, %c0_39] : memref<1x8x18x18xf32, #tpu.memory_space<vmem>>, vector<1x1x18x18xf32>
    %51 = vector.shape_cast %50 : vector<1x1x18x18xf32> to vector<18x18xf32>
    %52 = vector.shape_cast %49 : vector<18x18xf32> to vector<1x1x18x18xf32>
    tpu.vector_store %arg2[%c0_36, %c2_37, %c0_38, %c0_39], %52 {strides = array<i32>} : memref<1x8x18x18xf32, #tpu.memory_space<vmem>>, vector<1x1x18x18xf32>,
    %53 = vector.broadcast %45 : f32 to vector<16x18xf32>
    %54 = arith.mulf %53, %10 : vector<16x18xf32>
    %55 = vector.broadcast %46 : f32 to vector<16x18xf32>
    %56 = arith.addf %54, %55 : vector<16x18xf32>
    %cst_40 = arith.constant 0.000000e+00 : f32
    %57 = vector.broadcast %cst_40 : f32 to vector<16x18xf32>
    %58 = arith.maximumf %56, %57 : vector<16x18xf32>
    %c0_41 = arith.constant 0 : index
    %c2_42 = arith.constant 2 : index
    %c1_43 = arith.constant 1 : index
    %c0_44 = arith.constant 0 : index
    %59 = vector.load %arg2[%c0_41, %c2_42, %c1_43, %c0_44] : memref<1x8x18x18xf32, #tpu.memory_space<vmem>>, vector<1x1x16x18xf32>
    %60 = vector.shape_cast %59 : vector<1x1x16x18xf32> to vector<16x18xf32>
    %61 = vector.shape_cast %58 : vector<16x18xf32> to vector<1x1x16x18xf32>
    tpu.vector_store %arg2[%c0_41, %c2_42, %c1_43, %c0_44], %61 {strides = array<i32>} : memref<1x8x18x18xf32, #tpu.memory_space<vmem>>, vector<1x1x16x18xf32>,
    %c3 = arith.constant 3 : index
    %c0_45 = arith.constant 0 : index
    %62 = memref.load %arg0[%c3, %c0_45] : memref<8x2xf32, #tpu.memory_space<smem>>
    %c3_46 = arith.constant 3 : index
    %c1_47 = arith.constant 1 : index
    %63 = memref.load %arg0[%c3_46, %c1_47] : memref<8x2xf32, #tpu.memory_space<smem>>
    %64 = vector.broadcast %63 : f32 to vector<18x18xf32>
    %cst_48 = arith.constant 0.000000e+00 : f32
    %65 = vector.broadcast %cst_48 : f32 to vector<18x18xf32>
    %66 = arith.maximumf %64, %65 : vector<18x18xf32>
    %c0_49 = arith.constant 0 : index
    %c3_50 = arith.constant 3 : index
    %c0_51 = arith.constant 0 : index
    %c0_52 = arith.constant 0 : index
    %67 = vector.load %arg2[%c0_49, %c3_50, %c0_51, %c0_52] : memref<1x8x18x18xf32, #tpu.memory_space<vmem>>, vector<1x1x18x18xf32>
    %68 = vector.shape_cast %67 : vector<1x1x18x18xf32> to vector<18x18xf32>
    %69 = vector.shape_cast %66 : vector<18x18xf32> to vector<1x1x18x18xf32>
    tpu.vector_store %arg2[%c0_49, %c3_50, %c0_51, %c0_52], %69 {strides = array<i32>} : memref<1x8x18x18xf32, #tpu.memory_space<vmem>>, vector<1x1x18x18xf32>,
    %70 = vector.broadcast %62 : f32 to vector<16x18xf32>
    %71 = arith.mulf %70, %10 : vector<16x18xf32>
    %72 = vector.broadcast %63 : f32 to vector<16x18xf32>
    %73 = arith.addf %71, %72 : vector<16x18xf32>
    %cst_53 = arith.constant 0.000000e+00 : f32
    %74 = vector.broadcast %cst_53 : f32 to vector<16x18xf32>
    %75 = arith.maximumf %73, %74 : vector<16x18xf32>
    %c0_54 = arith.constant 0 : index
    %c3_55 = arith.constant 3 : index
    %c1_56 = arith.constant 1 : index
    %c0_57 = arith.constant 0 : index
    %76 = vector.load %arg2[%c0_54, %c3_55, %c1_56, %c0_57] : memref<1x8x18x18xf32, #tpu.memory_space<vmem>>, vector<1x1x16x18xf32>
    %77 = vector.shape_cast %76 : vector<1x1x16x18xf32> to vector<16x18xf32>
    %78 = vector.shape_cast %75 : vector<16x18xf32> to vector<1x1x16x18xf32>
    tpu.vector_store %arg2[%c0_54, %c3_55, %c1_56, %c0_57], %78 {strides = array<i32>} : memref<1x8x18x18xf32, #tpu.memory_space<vmem>>, vector<1x1x16x18xf32>,
    %c4 = arith.constant 4 : index
    %c0_58 = arith.constant 0 : index
    %79 = memref.load %arg0[%c4, %c0_58] : memref<8x2xf32, #tpu.memory_space<smem>>
    %c4_59 = arith.constant 4 : index
    %c1_60 = arith.constant 1 : index
    %80 = memref.load %arg0[%c4_59, %c1_60] : memref<8x2xf32, #tpu.memory_space<smem>>
    %81 = vector.broadcast %80 : f32 to vector<18x18xf32>
    %cst_61 = arith.constant 0.000000e+00 : f32
    %82 = vector.broadcast %cst_61 : f32 to vector<18x18xf32>
    %83 = arith.maximumf %81, %82 : vector<18x18xf32>
    %c0_62 = arith.constant 0 : index
    %c4_63 = arith.constant 4 : index
    %c0_64 = arith.constant 0 : index
    %c0_65 = arith.constant 0 : index
    %84 = vector.load %arg2[%c0_62, %c4_63, %c0_64, %c0_65] : memref<1x8x18x18xf32, #tpu.memory_space<vmem>>, vector<1x1x18x18xf32>
    %85 = vector.shape_cast %84 : vector<1x1x18x18xf32> to vector<18x18xf32>
    %86 = vector.shape_cast %83 : vector<18x18xf32> to vector<1x1x18x18xf32>
    tpu.vector_store %arg2[%c0_62, %c4_63, %c0_64, %c0_65], %86 {strides = array<i32>} : memref<1x8x18x18xf32, #tpu.memory_space<vmem>>, vector<1x1x18x18xf32>,
    %87 = vector.broadcast %79 : f32 to vector<16x18xf32>
    %88 = arith.mulf %87, %10 : vector<16x18xf32>
    %89 = vector.broadcast %80 : f32 to vector<16x18xf32>
    %90 = arith.addf %88, %89 : vector<16x18xf32>
    %cst_66 = arith.constant 0.000000e+00 : f32
    %91 = vector.broadcast %cst_66 : f32 to vector<16x18xf32>
    %92 = arith.maximumf %90, %91 : vector<16x18xf32>
    %c0_67 = arith.constant 0 : index
    %c4_68 = arith.constant 4 : index
    %c1_69 = arith.constant 1 : index
    %c0_70 = arith.constant 0 : index
    %93 = vector.load %arg2[%c0_67, %c4_68, %c1_69, %c0_70] : memref<1x8x18x18xf32, #tpu.memory_space<vmem>>, vector<1x1x16x18xf32>
    %94 = vector.shape_cast %93 : vector<1x1x16x18xf32> to vector<16x18xf32>
    %95 = vector.shape_cast %92 : vector<16x18xf32> to vector<1x1x16x18xf32>
    tpu.vector_store %arg2[%c0_67, %c4_68, %c1_69, %c0_70], %95 {strides = array<i32>} : memref<1x8x18x18xf32, #tpu.memory_space<vmem>>, vector<1x1x16x18xf32>,
    %c5 = arith.constant 5 : index
    %c0_71 = arith.constant 0 : index
    %96 = memref.load %arg0[%c5, %c0_71] : memref<8x2xf32, #tpu.memory_space<smem>>
    %c5_72 = arith.constant 5 : index
    %c1_73 = arith.constant 1 : index
    %97 = memref.load %arg0[%c5_72, %c1_73] : memref<8x2xf32, #tpu.memory_space<smem>>
    %98 = vector.broadcast %97 : f32 to vector<18x18xf32>
    %cst_74 = arith.constant 0.000000e+00 : f32
    %99 = vector.broadcast %cst_74 : f32 to vector<18x18xf32>
    %100 = arith.maximumf %98, %99 : vector<18x18xf32>
    %c0_75 = arith.constant 0 : index
    %c5_76 = arith.constant 5 : index
    %c0_77 = arith.constant 0 : index
    %c0_78 = arith.constant 0 : index
    %101 = vector.load %arg2[%c0_75, %c5_76, %c0_77, %c0_78] : memref<1x8x18x18xf32, #tpu.memory_space<vmem>>, vector<1x1x18x18xf32>
    %102 = vector.shape_cast %101 : vector<1x1x18x18xf32> to vector<18x18xf32>
    %103 = vector.shape_cast %100 : vector<18x18xf32> to vector<1x1x18x18xf32>
    tpu.vector_store %arg2[%c0_75, %c5_76, %c0_77, %c0_78], %103 {strides = array<i32>} : memref<1x8x18x18xf32, #tpu.memory_space<vmem>>, vector<1x1x18x18xf32>,
    %104 = vector.broadcast %96 : f32 to vector<16x18xf32>
    %105 = arith.mulf %104, %10 : vector<16x18xf32>
    %106 = vector.broadcast %97 : f32 to vector<16x18xf32>
    %107 = arith.addf %105, %106 : vector<16x18xf32>
    %cst_79 = arith.constant 0.000000e+00 : f32
    %108 = vector.broadcast %cst_79 : f32 to vector<16x18xf32>
    %109 = arith.maximumf %107, %108 : vector<16x18xf32>
    %c0_80 = arith.constant 0 : index
    %c5_81 = arith.constant 5 : index
    %c1_82 = arith.constant 1 : index
    %c0_83 = arith.constant 0 : index
    %110 = vector.load %arg2[%c0_80, %c5_81, %c1_82, %c0_83] : memref<1x8x18x18xf32, #tpu.memory_space<vmem>>, vector<1x1x16x18xf32>
    %111 = vector.shape_cast %110 : vector<1x1x16x18xf32> to vector<16x18xf32>
    %112 = vector.shape_cast %109 : vector<16x18xf32> to vector<1x1x16x18xf32>
    tpu.vector_store %arg2[%c0_80, %c5_81, %c1_82, %c0_83], %112 {strides = array<i32>} : memref<1x8x18x18xf32, #tpu.memory_space<vmem>>, vector<1x1x16x18xf32>,
    %c6 = arith.constant 6 : index
    %c0_84 = arith.constant 0 : index
    %113 = memref.load %arg0[%c6, %c0_84] : memref<8x2xf32, #tpu.memory_space<smem>>
    %c6_85 = arith.constant 6 : index
    %c1_86 = arith.constant 1 : index
    %114 = memref.load %arg0[%c6_85, %c1_86] : memref<8x2xf32, #tpu.memory_space<smem>>
    %115 = vector.broadcast %114 : f32 to vector<18x18xf32>
    %cst_87 = arith.constant 0.000000e+00 : f32
    %116 = vector.broadcast %cst_87 : f32 to vector<18x18xf32>
    %117 = arith.maximumf %115, %116 : vector<18x18xf32>
    %c0_88 = arith.constant 0 : index
    %c6_89 = arith.constant 6 : index
    %c0_90 = arith.constant 0 : index
    %c0_91 = arith.constant 0 : index
    %118 = vector.load %arg2[%c0_88, %c6_89, %c0_90, %c0_91] : memref<1x8x18x18xf32, #tpu.memory_space<vmem>>, vector<1x1x18x18xf32>
    %119 = vector.shape_cast %118 : vector<1x1x18x18xf32> to vector<18x18xf32>
    %120 = vector.shape_cast %117 : vector<18x18xf32> to vector<1x1x18x18xf32>
    tpu.vector_store %arg2[%c0_88, %c6_89, %c0_90, %c0_91], %120 {strides = array<i32>} : memref<1x8x18x18xf32, #tpu.memory_space<vmem>>, vector<1x1x18x18xf32>,
    %121 = vector.broadcast %113 : f32 to vector<16x18xf32>
    %122 = arith.mulf %121, %10 : vector<16x18xf32>
    %123 = vector.broadcast %114 : f32 to vector<16x18xf32>
    %124 = arith.addf %122, %123 : vector<16x18xf32>
    %cst_92 = arith.constant 0.000000e+00 : f32
    %125 = vector.broadcast %cst_92 : f32 to vector<16x18xf32>
    %126 = arith.maximumf %124, %125 : vector<16x18xf32>
    %c0_93 = arith.constant 0 : index
    %c6_94 = arith.constant 6 : index
    %c1_95 = arith.constant 1 : index
    %c0_96 = arith.constant 0 : index
    %127 = vector.load %arg2[%c0_93, %c6_94, %c1_95, %c0_96] : memref<1x8x18x18xf32, #tpu.memory_space<vmem>>, vector<1x1x16x18xf32>
    %128 = vector.shape_cast %127 : vector<1x1x16x18xf32> to vector<16x18xf32>
    %129 = vector.shape_cast %126 : vector<16x18xf32> to vector<1x1x16x18xf32>
    tpu.vector_store %arg2[%c0_93, %c6_94, %c1_95, %c0_96], %129 {strides = array<i32>} : memref<1x8x18x18xf32, #tpu.memory_space<vmem>>, vector<1x1x16x18xf32>,
    %c7 = arith.constant 7 : index
    %c0_97 = arith.constant 0 : index
    %130 = memref.load %arg0[%c7, %c0_97] : memref<8x2xf32, #tpu.memory_space<smem>>
    %c7_98 = arith.constant 7 : index
    %c1_99 = arith.constant 1 : index
    %131 = memref.load %arg0[%c7_98, %c1_99] : memref<8x2xf32, #tpu.memory_space<smem>>
    %132 = vector.broadcast %131 : f32 to vector<18x18xf32>
    %cst_100 = arith.constant 0.000000e+00 : f32
    %133 = vector.broadcast %cst_100 : f32 to vector<18x18xf32>
    %134 = arith.maximumf %132, %133 : vector<18x18xf32>
    %c0_101 = arith.constant 0 : index
    %c7_102 = arith.constant 7 : index
    %c0_103 = arith.constant 0 : index
    %c0_104 = arith.constant 0 : index
    %135 = vector.load %arg2[%c0_101, %c7_102, %c0_103, %c0_104] : memref<1x8x18x18xf32, #tpu.memory_space<vmem>>, vector<1x1x18x18xf32>
    %136 = vector.shape_cast %135 : vector<1x1x18x18xf32> to vector<18x18xf32>
    %137 = vector.shape_cast %134 : vector<18x18xf32> to vector<1x1x18x18xf32>
    tpu.vector_store %arg2[%c0_101, %c7_102, %c0_103, %c0_104], %137 {strides = array<i32>} : memref<1x8x18x18xf32, #tpu.memory_space<vmem>>, vector<1x1x18x18xf32>,
    %138 = vector.broadcast %130 : f32 to vector<16x18xf32>
    %139 = arith.mulf %138, %10 : vector<16x18xf32>
    %140 = vector.broadcast %131 : f32 to vector<16x18xf32>
    %141 = arith.addf %139, %140 : vector<16x18xf32>
    %cst_105 = arith.constant 0.000000e+00 : f32
    %142 = vector.broadcast %cst_105 : f32 to vector<16x18xf32>
    %143 = arith.maximumf %141, %142 : vector<16x18xf32>
    %c0_106 = arith.constant 0 : index
    %c7_107 = arith.constant 7 : index
    %c1_108 = arith.constant 1 : index
    %c0_109 = arith.constant 0 : index
    %144 = vector.load %arg2[%c0_106, %c7_107, %c1_108, %c0_109] : memref<1x8x18x18xf32, #tpu.memory_space<vmem>>, vector<1x1x16x18xf32>
    %145 = vector.shape_cast %144 : vector<1x1x16x18xf32> to vector<16x18xf32>
    %146 = vector.shape_cast %143 : vector<16x18xf32> to vector<1x1x16x18xf32>
    tpu.vector_store %arg2[%c0_106, %c7_107, %c1_108, %c0_109], %146 {strides = array<i32>} : memref<1x8x18x18xf32, #tpu.memory_space<vmem>>, vector<1x1x16x18xf32>,
    return
  }
}

</mosaic_0001>

<llo_original>
// kernel: model_forward.1
$region0: #{model_forward.1}
  #allocation0 [shape = 'u32[]', space=smem, size = 0x4, offset = 0x4, fixed_abs, tag = 'smem constant byte address 0x4 - core index']
  #allocation1 [shape = 'u32[144,128]{1,0:T(1,128)}', space=vmem, size = 0x12000, scoped, tag = 'internal scratch']
  %s0 = inlined_call_operand.vmem [shape: f32[8,2], index: 0, kind: input, shape index: {}]
  %s1 = inlined_call_operand.vmem [shape: f32[1,1,16,16], index: 1, kind: input, shape index: {}]
  %s2 = inlined_call_operand.vmem [shape: f32[1,8,18,18], index: 2, kind: output, shape index: {}]
  %s3 = sld [smem:[#allocation0]]
  $region22: #{model_forward.1} parent=0
    _
  %s5 = ssub.s32 1, %s3
  %s6 = scalar_select 0, %s5, %s3
  $region1: #{model_forward.1} parent=0
    #allocation2 [shape = 'u8[4096]{0}', space=smem, size = 0x1000, scoped, tag = 'input window, operand 0, single buffered']
    #allocation3 [shape = 's32[1]{0}', space=sflag, size = 0x4, scoped, tag = 'scoped memory for model_forward.1']
    %7 = vsyncpa [#allocation3], 0
    // Predicated region
    $region2: #{model_forward.1} parent=1 // pred_check
      _
    $region3: #{model_forward.1} parent=1 // pred_check_branch
      %9 = sbr.rel (0) target = $region5
    $region4: #{model_forward.1} parent=1 // pred_region
      %s11 = ssub.s32 128, 128
      %12 = vsyncadd [#allocation3], %s11
      %s14 = sshll.u32 %s0, 4
      %s15 = int_to_ptr.vmem [resolvable:$true] %s14
      %17 = dma.vmem_to_smem %s15, 128, [#allocation2], [#allocation3]
    $region5: #{model_forward.1} parent=1 // pred_fallthru
      _
    // Predicated region
    $region6: #{model_forward.1} parent=1 // pred_check
      _
    $region7: #{model_forward.1} parent=1 // pred_check_branch
      %19 = sbr.rel (0) target = $region9
    $region8: #{model_forward.1} parent=1 // pred_region
      _
    $region9: #{model_forward.1} parent=1 // pred_fallthru
      _
    // Predicated region
    $region10: #{model_forward.1} parent=1 // pred_check
      _
    $region11: #{model_forward.1} parent=1 // pred_check_branch
      %21 = sbr.rel (0) target = $region13
    $region12: #{model_forward.1} parent=1 // pred_region
      %22 = dma.done [#allocation3], 128
    $region13: #{model_forward.1} parent=1 // pred_fallthru
      _
    %23 = sfence
    %v24 = vld [vmem:[%s1] sm:$0xff]
    %v25 = vld [vmem:[%s1 + $0x8] sm:$0xff]
    %v26 = vlaneseq
    %v27 = vshrl.u32 %v26, 7
    %v28 = vadd.s32 %v27, 8
    %v29 = vlaneseq
    %v30 = vand.u32 %v29, 127
    %v31 = vadd.s32 %v27, 1
    %v32 = vadd.s32 %v28, 1
    %vm33 = vcmp.eq.s32.totalorder %v30, %v31
    %vm34 = vcmp.eq.s32.totalorder %v30, %v32
    %v35 = vsel %vm33, 1.0, 0.0
    %v36 = vsel %vm34, 1.0, 0.0
    %vm37 = vcmask 130048
    %v39 = vsel %vm37, %v24, 0
    %v42 = vsel %vm37, %v25, 0
    %44 = vmatprep.subr.mxu0 0.0
    %45 = vmatpush1.msra.mxu0 %v35
    %46 = vmatprep.subr.mxu0 0.0
    %47 = vmatpush1.msra.mxu0 %v36
    %48 = vmatprep.subr.mxu0 0.0
    %49 = vmatpush1.msra.mxu0 0.0
    %50 = vmatprep.subr.mxu0 0.0
    %51 = vmatpush1.msra.mxu0 0.0
    %52 = vmatprep.subr.mxu0 0.0
    %53 = vmatpush1.msra.mxu0 0.0
    %54 = vmatprep.subr.mxu0 0.0
    %55 = vmatpush1.msra.mxu0 0.0
    %56 = vmatprep.subr.mxu0 0.0
    %57 = vmatpush1.msra.mxu0 0.0
    %58 = vmatprep.subr.mxu0 0.0
    %59 = vmatpush1.msra.mxu0 0.0
    %60 = vmatprep.subr.mxu0 0.0
    %61 = vmatpush1.msra.mxu0 0.0
    %62 = vmatprep.subr.mxu0 0.0
    %63 = vmatpush1.msra.mxu0 0.0
    %64 = vmatprep.subr.mxu0 0.0
    %65 = vmatpush1.msra.mxu0 0.0
    %66 = vmatprep.subr.mxu0 0.0
    %67 = vmatpush1.msra.mxu0 0.0
    %68 = vmatprep.subr.mxu0 0.0
    %69 = vmatpush1.msra.mxu0 0.0
    %70 = vmatprep.subr.mxu0 0.0
    %71 = vmatpush1.msra.mxu0 0.0
    %72 = vmatprep.subr.mxu0 0.0
    %73 = vmatpush1.msra.mxu0 0.0
    %74 = vmatprep.subr.mxu0 0.0
    %75 = vmatpush1.msra.mxu0 0.0
    %76 = vmatprep.subr.mxu0 0.0
    %77 = vmatpush1.msra.mxu0 0.0
    %78 = vmatprep.subr.mxu0 0.0
    %79 = vmatpush1.msra.mxu0 0.0
    %80 = vmatprep.subr.mxu0 0.0
    %81 = vmatpush1.msra.mxu0 0.0
    %82 = vmatprep.subr.mxu0 0.0
    %83 = vmatpush1.msra.mxu0 0.0
    %84 = vmatprep.subr.mxu0 0.0
    %85 = vmatpush1.msra.mxu0 0.0
    %86 = vmatprep.subr.mxu0 0.0
    %87 = vmatpush1.msra.mxu0 0.0
    %88 = vmatprep.subr.mxu0 0.0
    %89 = vmatpush1.msra.mxu0 0.0
    %90 = vmatprep.subr.mxu0 0.0
    %91 = vmatpush1.msra.mxu0 0.0
    %92 = vmatprep.subr.mxu0 0.0
    %93 = vmatpush1.msra.mxu0 0.0
    %94 = vmatprep.subr.mxu0 0.0
    %95 = vmatpush1.msra.mxu0 0.0
    %96 = vmatprep.subr.mxu0 0.0
    %97 = vmatpush1.msra.mxu0 0.0
    %98 = vmatprep.subr.mxu0 0.0
    %99 = vmatpush1.msra.mxu0 0.0
    %100 = vmatprep.subr.mxu0 0.0
    %101 = vmatpush1.msra.mxu0 0.0
    %102 = vmatprep.subr.mxu0 0.0
    %103 = vmatpush1.msra.mxu0 0.0
    %104 = vmatprep.subr.mxu0 0.0
    %105 = vmatpush1.msra.mxu0 0.0
    %106 = vmatprep.subr.mxu0 0.0
    %107 = vmatpush1.msra.mxu0 0.0
    %108 = vmatprep.mubr.f32.mxu0 0.0
    %109 = vmatmul.mubr.f32.gmra.mrb[0].mxu0 %v39
    %v110 = vpop.f32.mrb[0].mxu0
    %v111 = vadd.f32 0.0, %v110
    %v112 = vpop.f32.mrb[0].mxu0
    %113 = vmatprep.mubr.f32.mxu0 0.0
    %114 = vmatmul.mubr.f32.gmra.mrb[0].mxu0 %v42
    %v115 = vpop.f32.mrb[0].mxu0
    %v116 = vadd.f32 0.0, %v115
    %v117 = vpop.f32.mrb[0].mxu0
    %118 = vdwg.mxu0
    %s119 = sld [smem:[#allocation2]]
    %s120 = sld [smem:[#allocation2 + $0x1]]
    %v121 = vstv %s120
    %v122 = vmax.f32 %v121, 0.0
    %vm123 = vcmask 146432
    %124 = vst.msk [vmem:[%s2] sm:$0xff] %vm123, %v122
    %125 = vst.msk [vmem:[%s2 + $0x8] sm:$0xff] %vm123, %v122
    %vm126 = vcmask 140288
    %127 = vst.msk [vmem:[%s2 + $0x10] sm:$0x3] %vm126, %v122
    %v128 = vstv %s119
    %v129 = vmul.f32 %v128, %v111
    %v130 = vmul.f32 %v128, %v116
    %v131 = vadd.f32 %v129, %v121
    %v132 = vadd.f32 %v130, %v121
    %v133 = vmax.f32 %v131, 0.0
    %v134 = vmax.f32 %v132, 0.0
    %135 = vst.msk [vmem:[%s2 + $0x1] sm:$0xff] %vm123, %v133
    %136 = vst.msk [vmem:[%s2 + $0x9] sm:$0xff] %vm123, %v134
    %s137 = sld [smem:[#allocation2 + $0x80]]
    %s138 = sld [smem:[#allocation2 + $0x81]]
    %v139 = vstv %s138
    %v140 = vmax.f32 %v139, 0.0
    %s141 = scalar_lea.vmem %s2, 24
    %142 = vst.msk [vmem:[%s141] sm:$0xff] %vm123, %v140
    %143 = vst.msk [vmem:[%s141 + $0x8] sm:$0xff] %vm123, %v140
    %144 = vst.msk [vmem:[%s141 + $0x10] sm:$0x3] %vm126, %v140
    %v145 = vstv %s137
    %v146 = vmul.f32 %v145, %v111
    %v147 = vmul.f32 %v145, %v116
    %v148 = vadd.f32 %v146, %v139
    %v149 = vadd.f32 %v147, %v139
    %v150 = vmax.f32 %v148, 0.0
    %v151 = vmax.f32 %v149, 0.0
    %152 = vst.msk [vmem:[%s141 + $0x1] sm:$0xff] %vm123, %v150
    %153 = vst.msk [vmem:[%s141 + $0x9] sm:$0xff] %vm123, %v151
    %s154 = sld [smem:[#allocation2 + $0x100]]
    %s155 = sld [smem:[#allocation2 + $0x101]]
    %v156 = vstv %s155
    %v157 = vmax.f32 %v156, 0.0
    %s158 = scalar_lea.vmem %s2, 48
    %159 = vst.msk [vmem:[%s158] sm:$0xff] %vm123, %v157
    %160 = vst.msk [vmem:[%s158 + $0x8] sm:$0xff] %vm123, %v157
    %161 = vst.msk [vmem:[%s158 + $0x10] sm:$0x3] %vm126, %v157
    %v162 = vstv %s154
    %v163 = vmul.f32 %v162, %v111
    %v164 = vmul.f32 %v162, %v116
    %v165 = vadd.f32 %v163, %v156
    %v166 = vadd.f32 %v164, %v156
    %v167 = vmax.f32 %v165, 0.0
    %v168 = vmax.f32 %v166, 0.0
    %169 = vst.msk [vmem:[%s158 + $0x1] sm:$0xff] %vm123, %v167
    %170 = vst.msk [vmem:[%s158 + $0x9] sm:$0xff] %vm123, %v168
    %s171 = sld [smem:[#allocation2 + $0x180]]
    %s172 = sld [smem:[#allocation2 + $0x181]]
    %v173 = vstv %s172
    %v174 = vmax.f32 %v173, 0.0
    %s175 = scalar_lea.vmem %s2, 72
    %176 = vst.msk [vmem:[%s175] sm:$0xff] %vm123, %v174
    %177 = vst.msk [vmem:[%s175 + $0x8] sm:$0xff] %vm123, %v174
    %178 = vst.msk [vmem:[%s175 + $0x10] sm:$0x3] %vm126, %v174
    %v179 = vstv %s171
    %v180 = vmul.f32 %v179, %v111
    %v181 = vmul.f32 %v179, %v116
    %v182 = vadd.f32 %v180, %v173
    %v183 = vadd.f32 %v181, %v173
    %v184 = vmax.f32 %v182, 0.0
    %v185 = vmax.f32 %v183, 0.0
    %186 = vst.msk [vmem:[%s175 + $0x1] sm:$0xff] %vm123, %v184
    %187 = vst.msk [vmem:[%s175 + $0x9] sm:$0xff] %vm123, %v185
    %s188 = sld [smem:[#allocation2 + $0x200]]
    %s189 = sld [smem:[#allocation2 + $0x201]]
    %v190 = vstv %s189
    %v191 = vmax.f32 %v190, 0.0
    %s192 = scalar_lea.vmem %s2, 96
    %193 = vst.msk [vmem:[%s192] sm:$0xff] %vm123, %v191
    %194 = vst.msk [vmem:[%s192 + $0x8] sm:$0xff] %vm123, %v191
    %195 = vst.msk [vmem:[%s192 + $0x10] sm:$0x3] %vm126, %v191
    %v196 = vstv %s188
    %v197 = vmul.f32 %v196, %v111
    %v198 = vmul.f32 %v196, %v116
    %v199 = vadd.f32 %v197, %v190
    %v200 = vadd.f32 %v198, %v190
    %v201 = vmax.f32 %v199, 0.0
    %v202 = vmax.f32 %v200, 0.0
    %203 = vst.msk [vmem:[%s192 + $0x1] sm:$0xff] %vm123, %v201
    %204 = vst.msk [vmem:[%s192 + $0x9] sm:$0xff] %vm123, %v202
    %s205 = sld [smem:[#allocation2 + $0x280]]
    %s206 = sld [smem:[#allocation2 + $0x281]]
    %v207 = vstv %s206
    %v208 = vmax.f32 %v207, 0.0
    %s209 = scalar_lea.vmem %s2, 120
    %210 = vst.msk [vmem:[%s209] sm:$0xff] %vm123, %v208
    %211 = vst.msk [vmem:[%s209 + $0x8] sm:$0xff] %vm123, %v208
    %212 = vst.msk [vmem:[%s209 + $0x10] sm:$0x3] %vm126, %v208
    %v213 = vstv %s205
    %v214 = vmul.f32 %v213, %v111
    %v215 = vmul.f32 %v213, %v116
    %v216 = vadd.f32 %v214, %v207
    %v217 = vadd.f32 %v215, %v207
    %v218 = vmax.f32 %v216, 0.0
    %v219 = vmax.f32 %v217, 0.0
    %220 = vst.msk [vmem:[%s209 + $0x1] sm:$0xff] %vm123, %v218
    %221 = vst.msk [vmem:[%s209 + $0x9] sm:$0xff] %vm123, %v219
    %s222 = sld [smem:[#allocation2 + $0x300]]
    %s223 = sld [smem:[#allocation2 + $0x301]]
    %v224 = vstv %s223
    %v225 = vmax.f32 %v224, 0.0
    %s226 = scalar_lea.vmem %s2, 144
    %227 = vst.msk [vmem:[%s226] sm:$0xff] %vm123, %v225
    %228 = vst.msk [vmem:[%s226 + $0x8] sm:$0xff] %vm123, %v225
    %229 = vst.msk [vmem:[%s226 + $0x10] sm:$0x3] %vm126, %v225
    %v230 = vstv %s222
    %v231 = vmul.f32 %v230, %v111
    %v232 = vmul.f32 %v230, %v116
    %v233 = vadd.f32 %v231, %v224
    %v234 = vadd.f32 %v232, %v224
    %v235 = vmax.f32 %v233, 0.0
    %v236 = vmax.f32 %v234, 0.0
    %237 = vst.msk [vmem:[%s226 + $0x1] sm:$0xff] %vm123, %v235
    %238 = vst.msk [vmem:[%s226 + $0x9] sm:$0xff] %vm123, %v236
    %s239 = sld [smem:[#allocation2 + $0x380]]
    %s240 = sld [smem:[#allocation2 + $0x381]]
    %v241 = vstv %s240
    %v242 = vmax.f32 %v241, 0.0
    %s243 = scalar_lea.vmem %s2, 168
    %244 = vst.msk [vmem:[%s243] sm:$0xff] %vm123, %v242
    %245 = vst.msk [vmem:[%s243 + $0x8] sm:$0xff] %vm123, %v242
    %246 = vst.msk [vmem:[%s243 + $0x10] sm:$0x3] %vm126, %v242
    %v247 = vstv %s239
    %v248 = vmul.f32 %v247, %v111
    %v249 = vmul.f32 %v247, %v116
    %v250 = vadd.f32 %v248, %v241
    %v251 = vadd.f32 %v249, %v241
    %v252 = vmax.f32 %v250, 0.0
    %v253 = vmax.f32 %v251, 0.0
    %254 = vst.msk [vmem:[%s243 + $0x1] sm:$0xff] %vm123, %v252
    %255 = vst.msk [vmem:[%s243 + $0x9] sm:$0xff] %vm123, %v253
    // Predicated region
    $region14: #{model_forward.1} parent=1 // pred_check
      _
    $region15: #{model_forward.1} parent=1 // pred_check_branch
      %257 = sbr.rel (0) target = $region17
    $region16: #{model_forward.1} parent=1 // pred_region
      _
    $region17: #{model_forward.1} parent=1 // pred_fallthru
      _
    // Predicated region
    $region18: #{model_forward.1} parent=1 // pred_check
      _
    $region19: #{model_forward.1} parent=1 // pred_check_branch
      %259 = sbr.rel (0) target = $region21
    $region20: #{model_forward.1} parent=1 // pred_region
      _
    $region21: #{model_forward.1} parent=1 // pred_fallthru
      _
    %260 = vsyncpa [#allocation3], 1

</llo_original>
